<compile_context>
chip_gen: v5e
topology: v5e:2x2
jax: 0.10.0
libtpu: 0.0.40
codegen_flags: <defaults>
</compile_context>

<pallas_src>
import jax
import jax.numpy as jnp
from jax.experimental import pallas as pl
from jax.experimental.pallas import tpu as pltpu

_OUT_PAD = 128  # fc4 output padded from 2 to 128 lanes (lane-dense MXU/store)


def _round_up(x, m):
    return (x + m - 1) // m * m


def _mlp_kernel(x_ref,
                w1_ref, b1_ref,
                w2_ref, b2_ref,
                w3_ref, b3_ref,
                w4_ref, b4_ref,
                o_ref):
    """Fused MLP forward for one batch tile (weights VMEM-resident)."""
    # fc1 + (dropout = identity) + sigmoid. bf16 matmul, f32 accumulate.
    x = x_ref[...]                                            # (tile_b, in) bf16
    h = jnp.dot(x, w1_ref[...], preferred_element_type=jnp.float32) + b1_ref[...]
    h = jax.nn.sigmoid(h)

    # fc2 + (dropout = identity) + sigmoid
    h = jnp.dot(h.astype(jnp.bfloat16), w2_ref[...],
                preferred_element_type=jnp.float32) + b2_ref[...]
    h = jax.nn.sigmoid(h)

    # fc3 + (dropout = identity) + sigmoid
    h = jnp.dot(h.astype(jnp.bfloat16), w3_ref[...],
                preferred_element_type=jnp.float32) + b3_ref[...]
    h = jax.nn.sigmoid(h)

    # fc4 (padded to _OUT_PAD features; columns >= 2 are zero weights/bias).
    logits = jnp.dot(h.astype(jnp.bfloat16), w4_ref[...],
                     preferred_element_type=jnp.float32) + b4_ref[...]

    # 2-class log_softmax, elementwise form (no XLU reduce over 2 lanes):
    #   logp[:, 0]  = -softplus(z1 - z0)
    #   logp[:, 1:] = -softplus(z0 - z1)   (only column 1 is kept by wrapper)
    d = logits[:, 1:2] - logits[:, 0:1]                       # (tile_b, 1)
    col = jax.lax.broadcasted_iota(jnp.int32, logits.shape, 1)
    sign = jnp.where(col == 0, 1.0, -1.0).astype(jnp.float32)
    logp = -jax.nn.softplus(d * sign)                         # (tile_b, _OUT_PAD)
    o_ref[...] = logp.astype(o_ref.dtype)


def mlp_classifier_forward(x, params, tile_b=256):
    """x: (B, input_size) float32. params: dict of w1..w4, b1..b4 (float32)."""
    B, in_size = x.shape
    w1, b1 = params["w1"], params["b1"]
    w2, b2 = params["w2"], params["b2"]
    w3, b3 = params["w3"], params["b3"]
    w4, b4 = params["w4"], params["b4"]

    # bf16 matmul operands; biases stay f32 (added onto the f32 accumulator).
    x_bf = x.astype(jnp.bfloat16)
    w1b, w2b, w3b = (w.astype(jnp.bfloat16) for w in (w1, w2, w3))
    b1f, b2f, b3f = (b.astype(jnp.float32) for b in (b1, b2, b3))
    # Pad fc4 from 2 -> _OUT_PAD output features (zeros) for lane-dense output.
    w4b = jnp.zeros((w4.shape[0], _OUT_PAD), jnp.bfloat16).at[:, :2].set(
        w4.astype(jnp.bfloat16))
    b4f = jnp.zeros((1, _OUT_PAD), jnp.float32).at[:, :2].set(
        b4.astype(jnp.float32))

    # Batch tile: multiple of 8 (sublane-friendly), capped at `tile_b`.
    tile_b = int(min(tile_b, _round_up(B, 8)))
    b_pad = _round_up(B, tile_b)
    if b_pad != B:
        # Padded rows produce valid (discarded) log-probs; sliced off below.
        x_bf = jnp.pad(x_bf, ((0, b_pad - B), (0, 0)))
    grid = (b_pad // tile_b,)

    def resident(shape):
        # Constant index_map: block stays in VMEM across all grid steps.
        return pl.BlockSpec(shape, lambda i: (0, 0))

    h1, h2, h3 = w1.shape[1], w2.shape[1], w3.shape[1]
    flops = 2 * b_pad * (in_size * h1 + h1 * h2 + h2 * h3 + h3 * _OUT_PAD)
    transcendentals = b_pad * (h1 + h2 + h3 + _OUT_PAD)
    weight_bytes = 2 * (w1b.size + w2b.size + w3b.size + w4b.size)
    bias_bytes = 4 * (b1f.size + b2f.size + b3f.size + b4f.size)
    bytes_accessed = (2 * x_bf.size + weight_bytes + bias_bytes
                      + 4 * b_pad * _OUT_PAD)

    out = pl.pallas_call(
        _mlp_kernel,
        out_shape=jax.ShapeDtypeStruct((b_pad, _OUT_PAD), jnp.float32),
        grid=grid,
        in_specs=[
            pl.BlockSpec((tile_b, in_size), lambda i: (i, 0)),
            resident(w1b.shape), resident(b1f.shape),
            resident(w2b.shape), resident(b2f.shape),
            resident(w3b.shape), resident(b3f.shape),
            resident(w4b.shape), resident(b4f.shape),
        ],
        out_specs=pl.BlockSpec((tile_b, _OUT_PAD), lambda i: (i, 0)),
        compiler_params=pltpu.CompilerParams(
            dimension_semantics=("parallel",),
            vmem_limit_bytes=8 << 20,
        ),
        cost_estimate=pl.CostEstimate(
            flops=flops,
            transcendentals=transcendentals,
            bytes_accessed=bytes_accessed,
        ),
    )(x_bf, w1b, b1f, w2b, b2f, w3b, b3f, w4b, b4f)

    return out[:B, :2]


def _reference_forward(x, params):
    """Pure-JAX reference with the same bf16-matmul / f32-elementwise split."""
    h = x.astype(jnp.bfloat16)
    for i in (1, 2, 3):
        w = params[f"w{i}"].astype(jnp.bfloat16)
        b = params[f"b{i}"].astype(jnp.float32)
        h = jax.nn.sigmoid(
            jnp.dot(h, w, preferred_element_type=jnp.float32) + b)
        h = h.astype(jnp.bfloat16)
    logits = jnp.dot(h, params["w4"].astype(jnp.bfloat16),
                     preferred_element_type=jnp.float32) + params["b4"]
    return jax.nn.log_softmax(logits, axis=1)


def init_params(key, input_size):
    """Deterministic init mirroring the PyTorch module's shapes.

    Weights: xavier-uniform (bound = sqrt(6/(fan_in+fan_out))),
    biases: PyTorch Linear default uniform(-1/sqrt(fan_in), 1/sqrt(fan_in)).
    Stored transposed relative to PyTorch: (in_features, out_features).
    """
    dims = [(input_size, 512), (512, 256), (256, 128), (128, 2)]
    params = {}
    keys = jax.random.split(key, 2 * len(dims))
    for i, (fan_in, fan_out) in enumerate(dims):
        wb = (6.0 / (fan_in + fan_out)) ** 0.5
        bb = 1.0 / (fan_in ** 0.5)
        params[f"w{i+1}"] = jax.random.uniform(
            keys[2 * i], (fan_in, fan_out), jnp.float32, -wb, wb)
        params[f"b{i+1}"] = jax.random.uniform(
            keys[2 * i + 1], (1, fan_out), jnp.float32, -bb, bb)
    return params


if __name__ == "__main__":
    key = jax.random.PRNGKey(0)
    k_x, k_p = jax.random.split(key)

    batch = 8
    input_size = 32
    x = jax.random.normal(k_x, (batch, input_size), jnp.float32)
    params = init_params(k_p, input_size)

    out = mlp_classifier_forward(x, params)
    out = jax.block_until_ready(out)

    assert out.shape == (batch, 2)
    assert bool(jnp.all(jnp.isfinite(out)))
    # log_softmax rows must exp-sum to ~1
    assert jnp.allclose(jnp.sum(jnp.exp(out), axis=1), 1.0, atol=1e-4)
    # match pure-JAX reference at the same (bf16-matmul) precision
    ref = _reference_forward(x, params)
    assert jnp.allclose(out, ref, atol=5e-2, rtol=5e-2)

    print("KERNEL_OK")
</pallas_src>

<mosaic_0001>
module attributes {stable_mosaic.version = 11 : i64} {
  func.func @_mlp_kernel(%arg0: i32, %arg1: memref<8x32xbf16, #tpu.memory_space<vmem>>, %arg2: memref<32x512xbf16, #tpu.memory_space<vmem>>, %arg3: memref<1x512xf32, #tpu.memory_space<vmem>>, %arg4: memref<512x256xbf16, #tpu.memory_space<vmem>>, %arg5: memref<1x256xf32, #tpu.memory_space<vmem>>, %arg6: memref<256x128xbf16, #tpu.memory_space<vmem>>, %arg7: memref<1x128xf32, #tpu.memory_space<vmem>>, %arg8: memref<128x128xbf16, #tpu.memory_space<vmem>>, %arg9: memref<1x128xf32, #tpu.memory_space<vmem>>, %arg10: memref<8x128xf32, #tpu.memory_space<vmem>>) attributes {dimension_semantics = [#tpu.dimension_semantics<parallel>], iteration_bounds = array<i64: 1>, scalar_prefetch = 0 : i64, scratch_operands = 0 : i64, tpu.core_type = #tpu.core_type<tc>, window_params = [{transform_indices = @transform_0, window_bounds = array<i64: 8, 32>}, {pipeline_mode = #tpu.pipeline_mode<synchronous>, transform_indices = @transform_1, window_bounds = array<i64: 32, 512>}, {pipeline_mode = #tpu.pipeline_mode<synchronous>, transform_indices = @transform_2, window_bounds = array<i64: 1, 512>}, {pipeline_mode = #tpu.pipeline_mode<synchronous>, transform_indices = @transform_3, window_bounds = array<i64: 512, 256>}, {pipeline_mode = #tpu.pipeline_mode<synchronous>, transform_indices = @transform_4, window_bounds = array<i64: 1, 256>}, {pipeline_mode = #tpu.pipeline_mode<synchronous>, transform_indices = @transform_5, window_bounds = array<i64: 256, 128>}, {pipeline_mode = #tpu.pipeline_mode<synchronous>, transform_indices = @transform_6, window_bounds = array<i64: 1, 128>}, {pipeline_mode = #tpu.pipeline_mode<synchronous>, transform_indices = @transform_7, window_bounds = array<i64: 128, 128>}, {pipeline_mode = #tpu.pipeline_mode<synchronous>, transform_indices = @transform_8, window_bounds = array<i64: 1, 128>}, {transform_indices = @transform_9, window_bounds = array<i64: 8, 128>}]} {
    %c0 = arith.constant 0 : index
    %c0_0 = arith.constant 0 : index
    %0 = vector.load %arg1[%c0, %c0_0] : memref<8x32xbf16, #tpu.memory_space<vmem>>, vector<8x32xbf16>
    %c0_1 = arith.constant 0 : index
    %c0_2 = arith.constant 0 : index
    %1 = vector.load %arg2[%c0_1, %c0_2] : memref<32x512xbf16, #tpu.memory_space<vmem>>, vector<32x512xbf16>
    %cst = arith.constant dense<0.000000e+00> : vector<8x512xf32>
    %2 = tpu.matmul %0, %1, %cst {dimension_numbers = #tpu.dot_dimension_numbers<[1], [0], [0], [1], [0, 0, 1, 1], [], []>} : vector<8x32xbf16>, vector<32x512xbf16>, vector<8x512xf32> -> vector<8x512xf32>
    %c0_3 = arith.constant 0 : index
    %c0_4 = arith.constant 0 : index
    %3 = vector.load %arg3[%c0_3, %c0_4] : memref<1x512xf32, #tpu.memory_space<vmem>>, vector<1x512xf32>
    %4 = vector.broadcast %3 : vector<1x512xf32> to vector<8x512xf32>
    %5 = arith.addf %2, %4 : vector<8x512xf32>
    %6 = arith.negf %5 : vector<8x512xf32>
    %7 = math.exp %6 : vector<8x512xf32>
    %cst_5 = arith.constant 1.000000e+00 : f32
    %8 = vector.broadcast %cst_5 : f32 to vector<8x512xf32>
    %9 = arith.addf %8, %7 : vector<8x512xf32>
    %10 = arith.divf %8, %9 : vector<8x512xf32>
    %11 = arith.truncf %10 : vector<8x512xf32> to vector<8x512xbf16>
    %c0_6 = arith.constant 0 : index
    %c0_7 = arith.constant 0 : index
    %12 = vector.load %arg4[%c0_6, %c0_7] : memref<512x256xbf16, #tpu.memory_space<vmem>>, vector<512x256xbf16>
    %cst_8 = arith.constant dense<0.000000e+00> : vector<8x256xf32>
    %13 = tpu.matmul %11, %12, %cst_8 {dimension_numbers = #tpu.dot_dimension_numbers<[1], [0], [0], [1], [0, 0, 1, 1], [], []>} : vector<8x512xbf16>, vector<512x256xbf16>, vector<8x256xf32> -> vector<8x256xf32>
    %c0_9 = arith.constant 0 : index
    %c0_10 = arith.constant 0 : index
    %14 = vector.load %arg5[%c0_9, %c0_10] : memref<1x256xf32, #tpu.memory_space<vmem>>, vector<1x256xf32>
    %15 = vector.broadcast %14 : vector<1x256xf32> to vector<8x256xf32>
    %16 = arith.addf %13, %15 : vector<8x256xf32>
    %17 = arith.negf %16 : vector<8x256xf32>
    %18 = math.exp %17 : vector<8x256xf32>
    %cst_11 = arith.constant 1.000000e+00 : f32
    %19 = vector.broadcast %cst_11 : f32 to vector<8x256xf32>
    %20 = arith.addf %19, %18 : vector<8x256xf32>
    %21 = arith.divf %19, %20 : vector<8x256xf32>
    %22 = arith.truncf %21 : vector<8x256xf32> to vector<8x256xbf16>
    %c0_12 = arith.constant 0 : index
    %c0_13 = arith.constant 0 : index
    %23 = vector.load %arg6[%c0_12, %c0_13] : memref<256x128xbf16, #tpu.memory_space<vmem>>, vector<256x128xbf16>
    %cst_14 = arith.constant dense<0.000000e+00> : vector<8x128xf32>
    %24 = tpu.matmul %22, %23, %cst_14 {dimension_numbers = #tpu.dot_dimension_numbers<[1], [0], [0], [1], [0, 0, 1, 1], [], []>} : vector<8x256xbf16>, vector<256x128xbf16>, vector<8x128xf32> -> vector<8x128xf32>
    %c0_15 = arith.constant 0 : index
    %c0_16 = arith.constant 0 : index
    %25 = vector.load %arg7[%c0_15, %c0_16] : memref<1x128xf32, #tpu.memory_space<vmem>>, vector<1x128xf32>
    %26 = vector.broadcast %25 : vector<1x128xf32> to vector<8x128xf32>
    %27 = arith.addf %24, %26 : vector<8x128xf32>
    %28 = arith.negf %27 : vector<8x128xf32>
    %29 = math.exp %28 : vector<8x128xf32>
    %cst_17 = arith.constant 1.000000e+00 : f32
    %30 = vector.broadcast %cst_17 : f32 to vector<8x128xf32>
    %31 = arith.addf %30, %29 : vector<8x128xf32>
    %32 = arith.divf %30, %31 : vector<8x128xf32>
    %33 = arith.truncf %32 : vector<8x128xf32> to vector<8x128xbf16>
    %c0_18 = arith.constant 0 : index
    %c0_19 = arith.constant 0 : index
    %34 = vector.load %arg8[%c0_18, %c0_19] : memref<128x128xbf16, #tpu.memory_space<vmem>>, vector<128x128xbf16>
    %cst_20 = arith.constant dense<0.000000e+00> : vector<8x128xf32>
    %35 = tpu.matmul %33, %34, %cst_20 {dimension_numbers = #tpu.dot_dimension_numbers<[1], [0], [0], [1], [0, 0, 1, 1], [], []>} : vector<8x128xbf16>, vector<128x128xbf16>, vector<8x128xf32> -> vector<8x128xf32>
    %c0_21 = arith.constant 0 : index
    %c0_22 = arith.constant 0 : index
    %36 = vector.load %arg9[%c0_21, %c0_22] : memref<1x128xf32, #tpu.memory_space<vmem>>, vector<1x128xf32>
    %37 = vector.broadcast %36 : vector<1x128xf32> to vector<8x128xf32>
    %38 = arith.addf %35, %37 : vector<8x128xf32>
    %39 = vector.extract_strided_slice %38 {offsets = [0, 1], sizes = [8, 1], strides = [1, 1]} : vector<8x128xf32> to vector<8x1xf32>
    %40 = vector.extract_strided_slice %38 {offsets = [0, 0], sizes = [8, 1], strides = [1, 1]} : vector<8x128xf32> to vector<8x1xf32>
    %41 = arith.subf %39, %40 : vector<8x1xf32>
    %42 = tpu.iota {dimensions = array<i32: 1>} : vector<8x128xi32>
    %c0_i32 = arith.constant 0 : i32
    %43 = vector.broadcast %c0_i32 : i32 to vector<8x128xi32>
    %44 = arith.cmpi eq, %42, %43 : vector<8x128xi32>
    %cst_23 = arith.constant 1.000000e+00 : f32
    %cst_24 = arith.constant -1.000000e+00 : f32
    %45 = vector.broadcast %cst_23 : f32 to vector<8x128xf32>
    %46 = vector.broadcast %cst_24 : f32 to vector<8x128xf32>
    %47 = arith.select %44, %45, %46 : vector<8x128xi1>, vector<8x128xf32>
    %48 = vector.broadcast %41 : vector<8x1xf32> to vector<8x128xf32>
    %49 = arith.mulf %48, %47 : vector<8x128xf32>
    %cst_25 = arith.constant 0.000000e+00 : f32
    %50 = vector.broadcast %cst_25 : f32 to vector<8x128xf32>
    %51 = arith.maximumf %49, %50 : vector<8x128xf32>
    %52 = vector.broadcast %cst_25 : f32 to vector<8x128xf32>
    %53 = arith.subf %49, %52 : vector<8x128xf32>
    %54 = arith.cmpf one, %53, %53 : vector<8x128xf32>
    %55 = vector.broadcast %cst_25 : f32 to vector<8x128xf32>
    %56 = arith.addf %49, %55 : vector<8x128xf32>
    %57 = math.absf %53 : vector<8x128xf32>
    %cst_26 = arith.constant 0.000000e+00 : f32
    %58 = vector.broadcast %cst_26 : f32 to vector<8x128xf32>
    %59 = arith.subf %58, %57 : vector<8x128xf32>
    %60 = math.exp %59 : vector<8x128xf32>
    %61 = math.log1p %60 : vector<8x128xf32>
    %62 = arith.addf %51, %61 : vector<8x128xf32>
    %63 = arith.select %54, %56, %62 : vector<8x128xi1>, vector<8x128xf32>
    %cst_27 = arith.constant 0.000000e+00 : f32
    %64 = vector.broadcast %cst_27 : f32 to vector<8x128xf32>
    %65 = arith.subf %64, %63 : vector<8x128xf32>
    %c0_28 = arith.constant 0 : index
    %c0_29 = arith.constant 0 : index
    %66 = vector.load %arg10[%c0_28, %c0_29] : memref<8x128xf32, #tpu.memory_space<vmem>>, vector<8x128xf32>
    tpu.vector_store %arg10[%c0_28, %c0_29], %65 {strides = array<i32>} : memref<8x128xf32, #tpu.memory_space<vmem>>, vector<8x128xf32>,
    return
  }
  func.func @transform_0(%arg0: i32) -> (i32, i32) {
    %c0_i32 = arith.constant 0 : i32
    %c0_i32_0 = arith.constant 0 : i32
    return %arg0, %c0_i32 : i32, i32
  }
  func.func @transform_1(%arg0: i32) -> (i32, i32) {
    %c0_i32 = arith.constant 0 : i32
    %c0_i32_0 = arith.constant 0 : i32
    %c0_i32_1 = arith.constant 0 : i32
    return %c0_i32, %c0_i32_0 : i32, i32
  }
  func.func @transform_2(%arg0: i32) -> (i32, i32) {
    %c0_i32 = arith.constant 0 : i32
    %c0_i32_0 = arith.constant 0 : i32
    %c0_i32_1 = arith.constant 0 : i32
    return %c0_i32, %c0_i32_0 : i32, i32
  }
  func.func @transform_3(%arg0: i32) -> (i32, i32) {
    %c0_i32 = arith.constant 0 : i32
    %c0_i32_0 = arith.constant 0 : i32
    %c0_i32_1 = arith.constant 0 : i32
    return %c0_i32, %c0_i32_0 : i32, i32
  }
  func.func @transform_4(%arg0: i32) -> (i32, i32) {
    %c0_i32 = arith.constant 0 : i32
    %c0_i32_0 = arith.constant 0 : i32
    %c0_i32_1 = arith.constant 0 : i32
    return %c0_i32, %c0_i32_0 : i32, i32
  }
  func.func @transform_5(%arg0: i32) -> (i32, i32) {
    %c0_i32 = arith.constant 0 : i32
    %c0_i32_0 = arith.constant 0 : i32
    %c0_i32_1 = arith.constant 0 : i32
    return %c0_i32, %c0_i32_0 : i32, i32
  }
  func.func @transform_6(%arg0: i32) -> (i32, i32) {
    %c0_i32 = arith.constant 0 : i32
    %c0_i32_0 = arith.constant 0 : i32
    %c0_i32_1 = arith.constant 0 : i32
    return %c0_i32, %c0_i32_0 : i32, i32
  }
  func.func @transform_7(%arg0: i32) -> (i32, i32) {
    %c0_i32 = arith.constant 0 : i32
    %c0_i32_0 = arith.constant 0 : i32
    %c0_i32_1 = arith.constant 0 : i32
    return %c0_i32, %c0_i32_0 : i32, i32
  }
  func.func @transform_8(%arg0: i32) -> (i32, i32) {
    %c0_i32 = arith.constant 0 : i32
    %c0_i32_0 = arith.constant 0 : i32
    %c0_i32_1 = arith.constant 0 : i32
    return %c0_i32, %c0_i32_0 : i32, i32
  }
  func.func @transform_9(%arg0: i32) -> (i32, i32) {
    %c0_i32 = arith.constant 0 : i32
    %c0_i32_0 = arith.constant 0 : i32
    return %arg0, %c0_i32 : i32, i32
  }
}

</mosaic_0001>

<llo_original>
// kernel: tpu_custom_call.1
$region0: #{tpu_custom_call.1}
  #allocation0 [shape = 'u32[]', space=smem, size = 0x4, offset = 0x4, fixed_abs, tag = 'smem constant byte address 0x4 - core index']
  #allocation1 [shape = 'u32[72,128]{1,0:T(1,128)}', space=vmem, size = 0x9000, scoped, tag = 'internal scratch']
  %s0 = inlined_call_operand.hbm [shape: bf16[8,32], index: 0, kind: input, shape index: {}]
  %s1 = inlined_call_operand.hbm [shape: bf16[32,512], index: 1, kind: input, shape index: {}]
  %s2 = inlined_call_operand.hbm [shape: f32[1,512], index: 2, kind: input, shape index: {}]
  %s3 = inlined_call_operand.hbm [shape: bf16[512,256], index: 3, kind: input, shape index: {}]
  %s4 = inlined_call_operand.vmem [shape: f32[1,256], index: 4, kind: input, shape index: {}]
  %s5 = inlined_call_operand.hbm [shape: bf16[256,128], index: 5, kind: input, shape index: {}]
  %s6 = inlined_call_operand.vmem [shape: f32[1,128], index: 6, kind: input, shape index: {}]
  %s7 = inlined_call_operand.hbm [shape: bf16[128,128], index: 7, kind: input, shape index: {}]
  %s8 = inlined_call_operand.vmem [shape: f32[1,128], index: 8, kind: input, shape index: {}]
  %s9 = inlined_call_operand.hbm [shape: f32[8,128], index: 9, kind: output, shape index: {}]
  %s10 = sld [smem:[#allocation0]]
  $region70: #{tpu_custom_call.1} parent=0
    _
  %s12 = ssub.s32 1, %s10
  %s13 = scalar_select 0, %s12, %s10
  $region1: #{tpu_custom_call.1} parent=0
    #allocation2 [shape = 'u8[2048]{0}', space=vmem, size = 0x800, scoped, tag = 'input window, operand 0, single buffered']
    #allocation3 [shape = 's32[1]{0}', space=sflag, size = 0x4, scoped, tag = 'scoped memory for tpu_custom_call.1']
    #allocation4 [shape = 's32[1]{0}', space=sflag, size = 0x4, scoped, tag = 'scoped memory for tpu_custom_call.1']
    #allocation5 [shape = 'u8[32768]{0}', space=vmem, size = 0x8000, scoped, tag = 'input window, operand 1, single buffered']
    #allocation6 [shape = 's32[1]{0}', space=sflag, size = 0x4, scoped, tag = 'scoped memory for tpu_custom_call.1']
    #allocation7 [shape = 'u8[2048]{0}', space=vmem, size = 0x800, scoped, tag = 'input window, operand 2, single buffered']
    #allocation8 [shape = 'u8[262144]{0}', space=vmem, size = 0x40000, scoped, tag = 'input window, operand 3, single buffered']
    #allocation9 [shape = 's32[1]{0}', space=sflag, size = 0x4, scoped, tag = 'scoped memory for tpu_custom_call.1']
    #allocation10 [shape = 'u8[65536]{0}', space=vmem, size = 0x10000, scoped, tag = 'input window, operand 5, single buffered']
    #allocation11 [shape = 'u8[32768]{0}', space=vmem, size = 0x8000, scoped, tag = 'input window, operand 7, single buffered']
    #allocation12 [shape = 's32[1]{0}', space=sflag, size = 0x4, scoped, tag = 'scoped memory for tpu_custom_call.1']
    #allocation13 [shape = 'u8[4096]{0}', space=vmem, size = 0x1000, scoped, tag = 'output window, operand 0, single buffered']
    %14 = vsyncpa [#allocation3], 0
    %15 = vsyncpa [#allocation6], 0
    %16 = vsyncpa [#allocation9], 0
    %17 = vsyncpa [#allocation12], 0
    %18 = vsyncpa [#allocation4], 0
    // Predicated region
    $region2: #{tpu_custom_call.1} parent=1 // pred_check
      _
    $region3: #{tpu_custom_call.1} parent=1 // pred_check_branch
      %20 = sbr.rel (0) target = $region5
    $region4: #{tpu_custom_call.1} parent=1 // pred_region
      %22 = vsyncadd [#allocation3], 0
      %s24 = sshll.u32 %s0, 4
      %s25 = int_to_ptr.hbm [resolvable:$true] %s24
      %s26 = sshll.u32 [#allocation2], 4
      %s27 = int_to_ptr.vmem [resolvable:$true] %s26
      %29 = dma.hbm_to_vmem [thread:$0]  %s25, 64, %s27, [#allocation3]
    $region5: #{tpu_custom_call.1} parent=1 // pred_fallthru
      _
    // Predicated region
    $region6: #{tpu_custom_call.1} parent=1 // pred_check
      _
    $region7: #{tpu_custom_call.1} parent=1 // pred_check_branch
      %31 = sbr.rel (0) target = $region9
    $region8: #{tpu_custom_call.1} parent=1 // pred_region
      %33 = vsyncadd [#allocation6], 0
      %s34 = sshll.u32 %s1, 4
      %s35 = int_to_ptr.hbm [resolvable:$true] %s34
      %s36 = sshll.u32 [#allocation5], 4
      %s37 = int_to_ptr.vmem [resolvable:$true] %s36
      %42 = dma.hbm_to_vmem [thread:$0]  %s35, 1024, %s37, [#allocation6], 256, 256, 16
    $region9: #{tpu_custom_call.1} parent=1 // pred_fallthru
      _
    // Predicated region
    $region10: #{tpu_custom_call.1} parent=1 // pred_check
      _
    $region11: #{tpu_custom_call.1} parent=1 // pred_check_branch
      %44 = sbr.rel (0) target = $region13
    $region12: #{tpu_custom_call.1} parent=1 // pred_region
      %46 = vsyncadd [#allocation6], 0
      %s48 = sshll.u32 %s2, 4
      %s49 = int_to_ptr.hbm [resolvable:$true] %s48
      %s50 = sshll.u32 [#allocation7], 4
      %s51 = int_to_ptr.vmem [resolvable:$true] %s50
      %53 = dma.hbm_to_vmem [thread:$0]  %s49, 64, %s51, [#allocation6]
    $region13: #{tpu_custom_call.1} parent=1 // pred_fallthru
      _
    // Predicated region
    $region14: #{tpu_custom_call.1} parent=1 // pred_check
      _
    $region15: #{tpu_custom_call.1} parent=1 // pred_check_branch
      %55 = sbr.rel (0) target = $region17
    $region16: #{tpu_custom_call.1} parent=1 // pred_region
      %57 = vsyncadd [#allocation9], 0
      %s58 = sshll.u32 %s3, 4
      %s59 = int_to_ptr.hbm [resolvable:$true] %s58
      %s60 = sshll.u32 [#allocation8], 4
      %s61 = int_to_ptr.vmem [resolvable:$true] %s60
      %66 = dma.hbm_to_vmem [thread:$0]  %s59, 8192, %s61, [#allocation9], 128, 128, 8
    $region17: #{tpu_custom_call.1} parent=1 // pred_fallthru
      _
    // Predicated region
    $region18: #{tpu_custom_call.1} parent=1 // pred_check
      _
    $region19: #{tpu_custom_call.1} parent=1 // pred_check_branch
      %68 = sbr.rel (0) target = $region21
    $region20: #{tpu_custom_call.1} parent=1 // pred_region
      _
    $region21: #{tpu_custom_call.1} parent=1 // pred_fallthru
      _
    // Predicated region
    $region22: #{tpu_custom_call.1} parent=1 // pred_check
      _
    $region23: #{tpu_custom_call.1} parent=1 // pred_check_branch
      %70 = sbr.rel (0) target = $region25
    $region24: #{tpu_custom_call.1} parent=1 // pred_region
      %72 = vsyncadd [#allocation9], 0
      %s73 = sshll.u32 %s5, 4
      %s74 = int_to_ptr.hbm [resolvable:$true] %s73
      %s75 = sshll.u32 [#allocation10], 4
      %s76 = int_to_ptr.vmem [resolvable:$true] %s75
      %81 = dma.hbm_to_vmem [thread:$0]  %s74, 2048, %s76, [#allocation9], 64, 64, 4
    $region25: #{tpu_custom_call.1} parent=1 // pred_fallthru
      _
    // Predicated region
    $region26: #{tpu_custom_call.1} parent=1 // pred_check
      _
    $region27: #{tpu_custom_call.1} parent=1 // pred_check_branch
      %83 = sbr.rel (0) target = $region29
    $region28: #{tpu_custom_call.1} parent=1 // pred_region
      _
    $region29: #{tpu_custom_call.1} parent=1 // pred_fallthru
      _
    // Predicated region
    $region30: #{tpu_custom_call.1} parent=1 // pred_check
      _
    $region31: #{tpu_custom_call.1} parent=1 // pred_check_branch
      %85 = sbr.rel (0) target = $region33
    $region32: #{tpu_custom_call.1} parent=1 // pred_region
      %87 = vsyncadd [#allocation12], 0
      %s88 = sshll.u32 %s7, 4
      %s89 = int_to_ptr.hbm [resolvable:$true] %s88
      %s90 = sshll.u32 [#allocation11], 4
      %s91 = int_to_ptr.vmem [resolvable:$true] %s90
      %96 = dma.hbm_to_vmem [thread:$0]  %s89, 1024, %s91, [#allocation12], 64, 64, 4
    $region33: #{tpu_custom_call.1} parent=1 // pred_fallthru
      _
    // Predicated region
    $region34: #{tpu_custom_call.1} parent=1 // pred_check
      _
    $region35: #{tpu_custom_call.1} parent=1 // pred_check_branch
      %98 = sbr.rel (0) target = $region37
    $region36: #{tpu_custom_call.1} parent=1 // pred_region
      _
    $region37: #{tpu_custom_call.1} parent=1 // pred_fallthru
      _
    // Predicated region
    $region38: #{tpu_custom_call.1} parent=1 // pred_check
      _
    $region39: #{tpu_custom_call.1} parent=1 // pred_check_branch
      %100 = sbr.rel (0) target = $region41
    $region40: #{tpu_custom_call.1} parent=1 // pred_region
      %102 = dma.done [#allocation3], 64
    $region41: #{tpu_custom_call.1} parent=1 // pred_fallthru
      _
    // Predicated region
    $region42: #{tpu_custom_call.1} parent=1 // pred_check
      _
    $region43: #{tpu_custom_call.1} parent=1 // pred_check_branch
      %104 = sbr.rel (0) target = $region45
    $region44: #{tpu_custom_call.1} parent=1 // pred_region
      %106 = dma.done [#allocation6], 1024
    $region45: #{tpu_custom_call.1} parent=1 // pred_fallthru
      _
    // Predicated region
    $region46: #{tpu_custom_call.1} parent=1 // pred_check
      _
    $region47: #{tpu_custom_call.1} parent=1 // pred_check_branch
      %108 = sbr.rel (0) target = $region49
    $region48: #{tpu_custom_call.1} parent=1 // pred_region
      %110 = dma.done [#allocation6], 64
    $region49: #{tpu_custom_call.1} parent=1 // pred_fallthru
      _
    // Predicated region
    $region50: #{tpu_custom_call.1} parent=1 // pred_check
      _
    $region51: #{tpu_custom_call.1} parent=1 // pred_check_branch
      %112 = sbr.rel (0) target = $region53
    $region52: #{tpu_custom_call.1} parent=1 // pred_region
      %114 = dma.done [#allocation9], 8192
    $region53: #{tpu_custom_call.1} parent=1 // pred_fallthru
      _
    // Predicated region
    $region54: #{tpu_custom_call.1} parent=1 // pred_check
      _
    $region55: #{tpu_custom_call.1} parent=1 // pred_check_branch
      %116 = sbr.rel (0) target = $region57
    $region56: #{tpu_custom_call.1} parent=1 // pred_region
      %118 = dma.done [#allocation9], 2048
    $region57: #{tpu_custom_call.1} parent=1 // pred_fallthru
      _
    // Predicated region
    $region58: #{tpu_custom_call.1} parent=1 // pred_check
      _
    $region59: #{tpu_custom_call.1} parent=1 // pred_check_branch
      %120 = sbr.rel (0) target = $region61
    $region60: #{tpu_custom_call.1} parent=1 // pred_region
      %122 = dma.done [#allocation12], 1024
    $region61: #{tpu_custom_call.1} parent=1 // pred_fallthru
      _
    %v124 = vld [vmem:[#allocation2] sm:$0xf]
    %v125 = vld [vmem:[#allocation5] sm:$0xff]
    %v126 = vld [vmem:[#allocation5 + $0x8] sm:$0xff]
    %v127 = vld [vmem:[#allocation5 + $0x10] sm:$0xff]
    %v128 = vld [vmem:[#allocation5 + $0x18] sm:$0xff]
    %v129 = vld [vmem:[#allocation5 + $0x20] sm:$0xff]
    %v130 = vld [vmem:[#allocation5 + $0x28] sm:$0xff]
    %v131 = vld [vmem:[#allocation5 + $0x30] sm:$0xff]
    %v132 = vld [vmem:[#allocation5 + $0x38] sm:$0xff]
    %v133 = vld [vmem:[#allocation7] sm:$0xf]
    %v135 = vperm.slane %v133, 0
    %v136 = vperm.slane %v133, 1
    %v137 = vperm.slane %v133, 2
    %v138 = vperm.slane %v133, 3
    %v151 = vunpack.c.l.b16 %v125
    %v152 = vunpack.c.h.b16 %v125
    %v153 = vunpack.c.l.b16 %v126
    %v154 = vunpack.c.h.b16 %v126
    %v155 = vunpack.c.l.b16 %v127
    %v156 = vunpack.c.h.b16 %v127
    %v157 = vunpack.c.l.b16 %v128
    %v158 = vunpack.c.h.b16 %v128
    %v159 = vunpack.c.l.b16 %v129
    %v160 = vunpack.c.h.b16 %v129
    %v161 = vunpack.c.l.b16 %v130
    %v162 = vunpack.c.h.b16 %v130
    %v163 = vunpack.c.l.b16 %v131
    %v164 = vunpack.c.h.b16 %v131
    %v165 = vunpack.c.l.b16 %v132
    %v166 = vunpack.c.h.b16 %v132
    %v167 = vpack.c.b16 %v155, %v151
    %v168 = vpack.c.b16 %v156, %v152
    %v169 = vpack.c.b16 %v157, %v153
    %v170 = vpack.c.b16 %v158, %v154
    %v171 = vpack.c.b16 %v163, %v159
    %v172 = vpack.c.b16 %v164, %v160
    %v173 = vpack.c.b16 %v165, %v161
    %v174 = vpack.c.b16 %v166, %v162
    %vm183 = vcmask 261120
    %v185 = vsel %vm183, %v124, 0
    %187 = vmatpush.bf16.msra.mxu0 0
    %188 = vmatpush.bf16.msra.mxu0 0
    %189 = vmatpush.bf16.msra.mxu0 0
    %190 = vmatpush.bf16.msra.mxu0 0
    %191 = vmatpush.bf16.msra.mxu0 0
    %192 = vmatpush.bf16.msra.mxu0 0
    %193 = vmatpush.bf16.msra.mxu0 %v171
    %194 = vmatpush.bf16.msra.mxu0 %v167
    %195 = vmatmul.bf16.gmra.mxu0 %v185
    %v196 = vpop.f32.mrf.mxu0
    %v197 = vadd.f32 %v135, %v196
    %v198 = vpop.f32.mrf.mxu0
    %199 = vdwg.mxu0
    %200 = vmatpush.bf16.msra.mxu0 0
    %201 = vmatpush.bf16.msra.mxu0 0
    %202 = vmatpush.bf16.msra.mxu0 0
    %203 = vmatpush.bf16.msra.mxu0 0
    %204 = vmatpush.bf16.msra.mxu0 0
    %205 = vmatpush.bf16.msra.mxu0 0
    %206 = vmatpush.bf16.msra.mxu0 %v172
    %207 = vmatpush.bf16.msra.mxu0 %v168
    %208 = vmatmul.bf16.gmra.mxu0 %v185
    %v209 = vpop.f32.mrf.mxu0
    %v210 = vadd.f32 %v136, %v209
    %v211 = vpop.f32.mrf.mxu0
    %212 = vdwg.mxu0
    %213 = vmatpush.bf16.msra.mxu0 0
    %214 = vmatpush.bf16.msra.mxu0 0
    %215 = vmatpush.bf16.msra.mxu0 0
    %216 = vmatpush.bf16.msra.mxu0 0
    %217 = vmatpush.bf16.msra.mxu0 0
    %218 = vmatpush.bf16.msra.mxu0 0
    %219 = vmatpush.bf16.msra.mxu0 %v173
    %220 = vmatpush.bf16.msra.mxu0 %v169
    %221 = vmatmul.bf16.gmra.mxu0 %v185
    %v222 = vpop.f32.mrf.mxu0
    %v223 = vadd.f32 %v137, %v222
    %v224 = vpop.f32.mrf.mxu0
    %225 = vdwg.mxu0
    %226 = vmatpush.bf16.msra.mxu0 0
    %227 = vmatpush.bf16.msra.mxu0 0
    %228 = vmatpush.bf16.msra.mxu0 0
    %229 = vmatpush.bf16.msra.mxu0 0
    %230 = vmatpush.bf16.msra.mxu0 0
    %231 = vmatpush.bf16.msra.mxu0 0
    %232 = vmatpush.bf16.msra.mxu0 %v174
    %233 = vmatpush.bf16.msra.mxu0 %v170
    %234 = vmatmul.bf16.gmra.mxu0 %v185
    %v235 = vpop.f32.mrf.mxu0
    %v236 = vadd.f32 %v138, %v235
    %v237 = vpop.f32.mrf.mxu0
    %238 = vdwg.mxu0
    %v239 = vxor.u32 %v197, 2147483648
    %v240 = vxor.u32 %v210, 2147483648
    %v241 = vxor.u32 %v223, 2147483648
    %v242 = vxor.u32 %v236, 2147483648
    %v243 = vmul.f32 %v239, 1.442695
    %v244 = vpow.pop %v243
    %v245 = vmul.f32 %v240, 1.442695
    %v246 = vpow.pop %v245
    %v247 = vmul.f32 %v241, 1.442695
    %v248 = vpow.pop %v247
    %v249 = vmul.f32 %v242, 1.442695
    %v250 = vpow.pop %v249
    %v251 = vadd.f32 %v244, 1.0
    %v252 = vadd.f32 %v246, 1.0
    %v253 = vadd.f32 %v248, 1.0
    %v254 = vadd.f32 %v250, 1.0
    %v255 = vrcp.pop %v251
    %v256 = vmul.f32 %v251, %v255
    %v257 = vsub.f32 1.0, %v256
    %v258 = vmul.f32 %v255, %v257
    %v259 = vadd.f32 %v255, %v258
    %vm260 = vweird.f32 %v251
    %vm261 = vweird.f32 %v255
    %vm262 = vmor %vm260, %vm261
    %v263 = vsel %vm262, %v255, %v259
    %v264 = vand.u32 2147483647, %v251
    %vm265 = vcmp.eq.f32.partialorder %v264, 8.507059e+37
    %v266 = vand.u32 %v251, 2147483648
    %v267 = vor.u32 1.1754944e-38, %v266
    %v268 = vsel %vm265, %v267, %v263
    %v269 = vmul.f32 1.0, %v268
    %v270 = vrcp.pop %v252
    %v271 = vmul.f32 %v252, %v270
    %v272 = vsub.f32 1.0, %v271
    %v273 = vmul.f32 %v270, %v272
    %v274 = vadd.f32 %v270, %v273
    %vm275 = vweird.f32 %v252
    %vm276 = vweird.f32 %v270
    %vm277 = vmor %vm275, %vm276
    %v278 = vsel %vm277, %v270, %v274
    %v279 = vand.u32 2147483647, %v252
    %vm280 = vcmp.eq.f32.partialorder %v279, 8.507059e+37
    %v281 = vand.u32 %v252, 2147483648
    %v282 = vor.u32 1.1754944e-38, %v281
    %v283 = vsel %vm280, %v282, %v278
    %v284 = vmul.f32 1.0, %v283
    %v285 = vrcp.pop %v253
    %v286 = vmul.f32 %v253, %v285
    %v287 = vsub.f32 1.0, %v286
    %v288 = vmul.f32 %v285, %v287
    %v289 = vadd.f32 %v285, %v288
    %vm290 = vweird.f32 %v253
    %vm291 = vweird.f32 %v285
    %vm292 = vmor %vm290, %vm291
    %v293 = vsel %vm292, %v285, %v289
    %v294 = vand.u32 2147483647, %v253
    %vm295 = vcmp.eq.f32.partialorder %v294, 8.507059e+37
    %v296 = vand.u32 %v253, 2147483648
    %v297 = vor.u32 1.1754944e-38, %v296
    %v298 = vsel %vm295, %v297, %v293
    %v299 = vmul.f32 1.0, %v298
    %v300 = vrcp.pop %v254
    %v301 = vmul.f32 %v254, %v300
    %v302 = vsub.f32 1.0, %v301
    %v303 = vmul.f32 %v300, %v302
    %v304 = vadd.f32 %v300, %v303
    %vm305 = vweird.f32 %v254
    %vm306 = vweird.f32 %v300
    %vm307 = vmor %vm305, %vm306
    %v308 = vsel %vm307, %v300, %v304
    %v309 = vand.u32 2147483647, %v254
    %vm310 = vcmp.eq.f32.partialorder %v309, 8.507059e+37
    %v311 = vand.u32 %v254, 2147483648
    %v312 = vor.u32 1.1754944e-38, %v311
    %v313 = vsel %vm310, %v312, %v308
    %v314 = vmul.f32 1.0, %v313
    %v315 = vpack.c.bf16 %v269, %v269
    %v316 = vpack.c.bf16 %v284, %v284
    %v317 = vpack.c.bf16 %v299, %v299
    %v318 = vpack.c.bf16 %v314, %v314
    %v319 = vld [vmem:[#allocation8] sm:$0xff]
    %v320 = vld [vmem:[#allocation8 + $0x8] sm:$0xff]
    %v321 = vld [vmem:[#allocation8 + $0x10] sm:$0xff]
    %v322 = vld [vmem:[#allocation8 + $0x18] sm:$0xff]
    %v323 = vld [vmem:[#allocation8 + $0x20] sm:$0xff]
    %v324 = vld [vmem:[#allocation8 + $0x28] sm:$0xff]
    %v325 = vld [vmem:[#allocation8 + $0x30] sm:$0xff]
    %v326 = vld [vmem:[#allocation8 + $0x38] sm:$0xff]
    %v327 = vld [vmem:[#allocation8 + $0x40] sm:$0xff]
    %v328 = vld [vmem:[#allocation8 + $0x48] sm:$0xff]
    %v329 = vld [vmem:[#allocation8 + $0x50] sm:$0xff]
    %v330 = vld [vmem:[#allocation8 + $0x58] sm:$0xff]
    %v331 = vld [vmem:[#allocation8 + $0x60] sm:$0xff]
    %v332 = vld [vmem:[#allocation8 + $0x68] sm:$0xff]
    %v333 = vld [vmem:[#allocation8 + $0x70] sm:$0xff]
    %v334 = vld [vmem:[#allocation8 + $0x78] sm:$0xff]
    %v335 = vld [vmem:[#allocation8 + $0x80] sm:$0xff]
    %v336 = vld [vmem:[#allocation8 + $0x88] sm:$0xff]
    %v337 = vld [vmem:[#allocation8 + $0x90] sm:$0xff]
    %v338 = vld [vmem:[#allocation8 + $0x98] sm:$0xff]
    %v339 = vld [vmem:[#allocation8 + $0xa0] sm:$0xff]
    %v340 = vld [vmem:[#allocation8 + $0xa8] sm:$0xff]
    %v341 = vld [vmem:[#allocation8 + $0xb0] sm:$0xff]
    %v342 = vld [vmem:[#allocation8 + $0xb8] sm:$0xff]
    %v343 = vld [vmem:[#allocation8 + $0xc0] sm:$0xff]
    %v344 = vld [vmem:[#allocation8 + $0xc8] sm:$0xff]
    %v345 = vld [vmem:[#allocation8 + $0xd0] sm:$0xff]
    %v346 = vld [vmem:[#allocation8 + $0xd8] sm:$0xff]
    %v347 = vld [vmem:[#allocation8 + $0xe0] sm:$0xff]
    %v348 = vld [vmem:[#allocation8 + $0xe8] sm:$0xff]
    %v349 = vld [vmem:[#allocation8 + $0xf0] sm:$0xff]
    %v350 = vld [vmem:[#allocation8 + $0xf8] sm:$0xff]
    %v351 = vld [vmem:[#allocation8 + $0x100] sm:$0xff]
    %v352 = vld [vmem:[#allocation8 + $0x108] sm:$0xff]
    %v353 = vld [vmem:[#allocation8 + $0x110] sm:$0xff]
    %v354 = vld [vmem:[#allocation8 + $0x118] sm:$0xff]
    %v355 = vld [vmem:[#allocation8 + $0x120] sm:$0xff]
    %v356 = vld [vmem:[#allocation8 + $0x128] sm:$0xff]
    %v357 = vld [vmem:[#allocation8 + $0x130] sm:$0xff]
    %v358 = vld [vmem:[#allocation8 + $0x138] sm:$0xff]
    %v359 = vld [vmem:[#allocation8 + $0x140] sm:$0xff]
    %v360 = vld [vmem:[#allocation8 + $0x148] sm:$0xff]
    %v361 = vld [vmem:[#allocation8 + $0x150] sm:$0xff]
    %v362 = vld [vmem:[#allocation8 + $0x158] sm:$0xff]
    %v363 = vld [vmem:[#allocation8 + $0x160] sm:$0xff]
    %v364 = vld [vmem:[#allocation8 + $0x168] sm:$0xff]
    %v365 = vld [vmem:[#allocation8 + $0x170] sm:$0xff]
    %v366 = vld [vmem:[#allocation8 + $0x178] sm:$0xff]
    %v367 = vld [vmem:[#allocation8 + $0x180] sm:$0xff]
    %v368 = vld [vmem:[#allocation8 + $0x188] sm:$0xff]
    %v369 = vld [vmem:[#allocation8 + $0x190] sm:$0xff]
    %v370 = vld [vmem:[#allocation8 + $0x198] sm:$0xff]
    %v371 = vld [vmem:[#allocation8 + $0x1a0] sm:$0xff]
    %v372 = vld [vmem:[#allocation8 + $0x1a8] sm:$0xff]
    %v373 = vld [vmem:[#allocation8 + $0x1b0] sm:$0xff]
    %v374 = vld [vmem:[#allocation8 + $0x1b8] sm:$0xff]
    %v375 = vld [vmem:[#allocation8 + $0x1c0] sm:$0xff]
    %v376 = vld [vmem:[#allocation8 + $0x1c8] sm:$0xff]
    %v377 = vld [vmem:[#allocation8 + $0x1d0] sm:$0xff]
    %v378 = vld [vmem:[#allocation8 + $0x1d8] sm:$0xff]
    %v379 = vld [vmem:[#allocation8 + $0x1e0] sm:$0xff]
    %v380 = vld [vmem:[#allocation8 + $0x1e8] sm:$0xff]
    %v381 = vld [vmem:[#allocation8 + $0x1f0] sm:$0xff]
    %v382 = vld [vmem:[#allocation8 + $0x1f8] sm:$0xff]
    %v383 = vld [vmem:[%s4] sm:$0x3]
    %v385 = vperm.slane %v383, 0
    %v386 = vperm.slane %v383, 1
    %v453 = vunpack.c.l.b16 %v319
    %v454 = vunpack.c.h.b16 %v319
    %v455 = vunpack.c.l.b16 %v320
    %v456 = vunpack.c.h.b16 %v320
    %v457 = vunpack.c.l.b16 %v321
    %v458 = vunpack.c.h.b16 %v321
    %v459 = vunpack.c.l.b16 %v322
    %v460 = vunpack.c.h.b16 %v322
    %v461 = vunpack.c.l.b16 %v323
    %v462 = vunpack.c.h.b16 %v323
    %v463 = vunpack.c.l.b16 %v324
    %v464 = vunpack.c.h.b16 %v324
    %v465 = vunpack.c.l.b16 %v325
    %v466 = vunpack.c.h.b16 %v325
    %v467 = vunpack.c.l.b16 %v326
    %v468 = vunpack.c.h.b16 %v326
    %v469 = vunpack.c.l.b16 %v327
    %v470 = vunpack.c.h.b16 %v327
    %v471 = vunpack.c.l.b16 %v328
    %v472 = vunpack.c.h.b16 %v328
    %v473 = vunpack.c.l.b16 %v329
    %v474 = vunpack.c.h.b16 %v329
    %v475 = vunpack.c.l.b16 %v330
    %v476 = vunpack.c.h.b16 %v330
    %v477 = vunpack.c.l.b16 %v331
    %v478 = vunpack.c.h.b16 %v331
    %v479 = vunpack.c.l.b16 %v332
    %v480 = vunpack.c.h.b16 %v332
    %v481 = vunpack.c.l.b16 %v333
    %v482 = vunpack.c.h.b16 %v333
    %v483 = vunpack.c.l.b16 %v334
    %v484 = vunpack.c.h.b16 %v334
    %v485 = vunpack.c.l.b16 %v335
    %v486 = vunpack.c.h.b16 %v335
    %v487 = vunpack.c.l.b16 %v336
    %v488 = vunpack.c.h.b16 %v336
    %v489 = vunpack.c.l.b16 %v337
    %v490 = vunpack.c.h.b16 %v337
    %v491 = vunpack.c.l.b16 %v338
    %v492 = vunpack.c.h.b16 %v338
    %v493 = vunpack.c.l.b16 %v339
    %v494 = vunpack.c.h.b16 %v339
    %v495 = vunpack.c.l.b16 %v340
    %v496 = vunpack.c.h.b16 %v340
    %v497 = vunpack.c.l.b16 %v341
    %v498 = vunpack.c.h.b16 %v341
    %v499 = vunpack.c.l.b16 %v342
    %v500 = vunpack.c.h.b16 %v342
    %v501 = vunpack.c.l.b16 %v343
    %v502 = vunpack.c.h.b16 %v343
    %v503 = vunpack.c.l.b16 %v344
    %v504 = vunpack.c.h.b16 %v344
    %v505 = vunpack.c.l.b16 %v345
    %v506 = vunpack.c.h.b16 %v345
    %v507 = vunpack.c.l.b16 %v346
    %v508 = vunpack.c.h.b16 %v346
    %v509 = vunpack.c.l.b16 %v347
    %v510 = vunpack.c.h.b16 %v347
    %v511 = vunpack.c.l.b16 %v348
    %v512 = vunpack.c.h.b16 %v348
    %v513 = vunpack.c.l.b16 %v349
    %v514 = vunpack.c.h.b16 %v349
    %v515 = vunpack.c.l.b16 %v350
    %v516 = vunpack.c.h.b16 %v350
    %v517 = vunpack.c.l.b16 %v351
    %v518 = vunpack.c.h.b16 %v351
    %v519 = vunpack.c.l.b16 %v352
    %v520 = vunpack.c.h.b16 %v352
    %v521 = vunpack.c.l.b16 %v353
    %v522 = vunpack.c.h.b16 %v353
    %v523 = vunpack.c.l.b16 %v354
    %v524 = vunpack.c.h.b16 %v354
    %v525 = vunpack.c.l.b16 %v355
    %v526 = vunpack.c.h.b16 %v355
    %v527 = vunpack.c.l.b16 %v356
    %v528 = vunpack.c.h.b16 %v356
    %v529 = vunpack.c.l.b16 %v357
    %v530 = vunpack.c.h.b16 %v357
    %v531 = vunpack.c.l.b16 %v358
    %v532 = vunpack.c.h.b16 %v358
    %v533 = vunpack.c.l.b16 %v359
    %v534 = vunpack.c.h.b16 %v359
    %v535 = vunpack.c.l.b16 %v360
    %v536 = vunpack.c.h.b16 %v360
    %v537 = vunpack.c.l.b16 %v361
    %v538 = vunpack.c.h.b16 %v361
    %v539 = vunpack.c.l.b16 %v362
    %v540 = vunpack.c.h.b16 %v362
    %v541 = vunpack.c.l.b16 %v363
    %v542 = vunpack.c.h.b16 %v363
    %v543 = vunpack.c.l.b16 %v364
    %v544 = vunpack.c.h.b16 %v364
    %v545 = vunpack.c.l.b16 %v365
    %v546 = vunpack.c.h.b16 %v365
    %v547 = vunpack.c.l.b16 %v366
    %v548 = vunpack.c.h.b16 %v366
    %v549 = vunpack.c.l.b16 %v367
    %v550 = vunpack.c.h.b16 %v367
    %v551 = vunpack.c.l.b16 %v368
    %v552 = vunpack.c.h.b16 %v368
    %v553 = vunpack.c.l.b16 %v369
    %v554 = vunpack.c.h.b16 %v369
    %v555 = vunpack.c.l.b16 %v370
    %v556 = vunpack.c.h.b16 %v370
    %v557 = vunpack.c.l.b16 %v371
    %v558 = vunpack.c.h.b16 %v371
    %v559 = vunpack.c.l.b16 %v372
    %v560 = vunpack.c.h.b16 %v372
    %v561 = vunpack.c.l.b16 %v373
    %v562 = vunpack.c.h.b16 %v373
    %v563 = vunpack.c.l.b16 %v374
    %v564 = vunpack.c.h.b16 %v374
    %v565 = vunpack.c.l.b16 %v375
    %v566 = vunpack.c.h.b16 %v375
    %v567 = vunpack.c.l.b16 %v376
    %v568 = vunpack.c.h.b16 %v376
    %v569 = vunpack.c.l.b16 %v377
    %v570 = vunpack.c.h.b16 %v377
    %v571 = vunpack.c.l.b16 %v378
    %v572 = vunpack.c.h.b16 %v378
    %v573 = vunpack.c.l.b16 %v379
    %v574 = vunpack.c.h.b16 %v379
    %v575 = vunpack.c.l.b16 %v380
    %v576 = vunpack.c.h.b16 %v380
    %v577 = vunpack.c.l.b16 %v381
    %v578 = vunpack.c.h.b16 %v381
    %v579 = vunpack.c.l.b16 %v382
    %v580 = vunpack.c.h.b16 %v382
    %v581 = vpack.c.b16 %v455, %v453
    %v582 = vpack.c.b16 %v456, %v454
    %v583 = vpack.c.b16 %v459, %v457
    %v584 = vpack.c.b16 %v460, %v458
    %v585 = vpack.c.b16 %v463, %v461
    %v586 = vpack.c.b16 %v464, %v462
    %v587 = vpack.c.b16 %v467, %v465
    %v588 = vpack.c.b16 %v468, %v466
    %v589 = vpack.c.b16 %v471, %v469
    %v590 = vpack.c.b16 %v472, %v470
    %v591 = vpack.c.b16 %v475, %v473
    %v592 = vpack.c.b16 %v476, %v474
    %v593 = vpack.c.b16 %v479, %v477
    %v594 = vpack.c.b16 %v480, %v478
    %v595 = vpack.c.b16 %v483, %v481
    %v596 = vpack.c.b16 %v484, %v482
    %v597 = vpack.c.b16 %v487, %v485
    %v598 = vpack.c.b16 %v488, %v486
    %v599 = vpack.c.b16 %v491, %v489
    %v600 = vpack.c.b16 %v492, %v490
    %v601 = vpack.c.b16 %v495, %v493
    %v602 = vpack.c.b16 %v496, %v494
    %v603 = vpack.c.b16 %v499, %v497
    %v604 = vpack.c.b16 %v500, %v498
    %v605 = vpack.c.b16 %v503, %v501
    %v606 = vpack.c.b16 %v504, %v502
    %v607 = vpack.c.b16 %v507, %v505
    %v608 = vpack.c.b16 %v508, %v506
    %v609 = vpack.c.b16 %v511, %v509
    %v610 = vpack.c.b16 %v512, %v510
    %v611 = vpack.c.b16 %v515, %v513
    %v612 = vpack.c.b16 %v516, %v514
    %v613 = vpack.c.b16 %v519, %v517
    %v614 = vpack.c.b16 %v520, %v518
    %v615 = vpack.c.b16 %v523, %v521
    %v616 = vpack.c.b16 %v524, %v522
    %v617 = vpack.c.b16 %v527, %v525
    %v618 = vpack.c.b16 %v528, %v526
    %v619 = vpack.c.b16 %v531, %v529
    %v620 = vpack.c.b16 %v532, %v530
    %v621 = vpack.c.b16 %v535, %v533
    %v622 = vpack.c.b16 %v536, %v534
    %v623 = vpack.c.b16 %v539, %v537
    %v624 = vpack.c.b16 %v540, %v538
    %v625 = vpack.c.b16 %v543, %v541
    %v626 = vpack.c.b16 %v544, %v542
    %v627 = vpack.c.b16 %v547, %v545
    %v628 = vpack.c.b16 %v548, %v546
    %v629 = vpack.c.b16 %v551, %v549
    %v630 = vpack.c.b16 %v552, %v550
    %v631 = vpack.c.b16 %v555, %v553
    %v632 = vpack.c.b16 %v556, %v554
    %v633 = vpack.c.b16 %v559, %v557
    %v634 = vpack.c.b16 %v560, %v558
    %v635 = vpack.c.b16 %v563, %v561
    %v636 = vpack.c.b16 %v564, %v562
    %v637 = vpack.c.b16 %v567, %v565
    %v638 = vpack.c.b16 %v568, %v566
    %v639 = vpack.c.b16 %v571, %v569
    %v640 = vpack.c.b16 %v572, %v570
    %v641 = vpack.c.b16 %v575, %v573
    %v642 = vpack.c.b16 %v576, %v574
    %v643 = vpack.c.b16 %v579, %v577
    %v644 = vpack.c.b16 %v580, %v578
    %709 = vmatpush.bf16.msra.mxu0 %v595
    %710 = vmatpush.bf16.msra.mxu0 %v593
    %711 = vmatpush.bf16.msra.mxu0 %v591
    %712 = vmatpush.bf16.msra.mxu0 %v589
    %713 = vmatpush.bf16.msra.mxu0 %v587
    %714 = vmatpush.bf16.msra.mxu0 %v585
    %715 = vmatpush.bf16.msra.mxu0 %v583
    %716 = vmatpush.bf16.msra.mxu0 %v581
    %717 = vmatmul.bf16.gmra.mxu0 %v315
    %v718 = vpop.f32.mrf.mxu0
    %v719 = vadd.f32 %v385, %v718
    %v720 = vpop.f32.mrf.mxu0
    %721 = vdwg.mxu0
    %722 = vmatpush.bf16.msra.mxu0 %v611
    %723 = vmatpush.bf16.msra.mxu0 %v609
    %724 = vmatpush.bf16.msra.mxu0 %v607
    %725 = vmatpush.bf16.msra.mxu0 %v605
    %726 = vmatpush.bf16.msra.mxu0 %v603
    %727 = vmatpush.bf16.msra.mxu0 %v601
    %728 = vmatpush.bf16.msra.mxu0 %v599
    %729 = vmatpush.bf16.msra.mxu0 %v597
    %730 = vmatmul.bf16.gmra.mxu0 %v316
    %v731 = vpop.f32.mrf.mxu0
    %v732 = vadd.f32 %v719, %v731
    %v733 = vpop.f32.mrf.mxu0
    %734 = vdwg.mxu0
    %735 = vmatpush.bf16.msra.mxu0 %v627
    %736 = vmatpush.bf16.msra.mxu0 %v625
    %737 = vmatpush.bf16.msra.mxu0 %v623
    %738 = vmatpush.bf16.msra.mxu0 %v621
    %739 = vmatpush.bf16.msra.mxu0 %v619
    %740 = vmatpush.bf16.msra.mxu0 %v617
    %741 = vmatpush.bf16.msra.mxu0 %v615
    %742 = vmatpush.bf16.msra.mxu0 %v613
    %743 = vmatmul.bf16.gmra.mxu0 %v317
    %v744 = vpop.f32.mrf.mxu0
    %v745 = vadd.f32 %v732, %v744
    %v746 = vpop.f32.mrf.mxu0
    %747 = vdwg.mxu0
    %748 = vmatpush.bf16.msra.mxu0 %v643
    %749 = vmatpush.bf16.msra.mxu0 %v641
    %750 = vmatpush.bf16.msra.mxu0 %v639
    %751 = vmatpush.bf16.msra.mxu0 %v637
    %752 = vmatpush.bf16.msra.mxu0 %v635
    %753 = vmatpush.bf16.msra.mxu0 %v633
    %754 = vmatpush.bf16.msra.mxu0 %v631
    %755 = vmatpush.bf16.msra.mxu0 %v629
    %756 = vmatmul.bf16.gmra.mxu0 %v318
    %v757 = vpop.f32.mrf.mxu0
    %v758 = vadd.f32 %v745, %v757
    %v759 = vpop.f32.mrf.mxu0
    %760 = vdwg.mxu0
    %761 = vmatpush.bf16.msra.mxu0 %v596
    %762 = vmatpush.bf16.msra.mxu0 %v594
    %763 = vmatpush.bf16.msra.mxu0 %v592
    %764 = vmatpush.bf16.msra.mxu0 %v590
    %765 = vmatpush.bf16.msra.mxu0 %v588
    %766 = vmatpush.bf16.msra.mxu0 %v586
    %767 = vmatpush.bf16.msra.mxu0 %v584
    %768 = vmatpush.bf16.msra.mxu0 %v582
    %769 = vmatmul.bf16.gmra.mxu0 %v315
    %v770 = vpop.f32.mrf.mxu0
    %v771 = vadd.f32 %v386, %v770
    %v772 = vpop.f32.mrf.mxu0
    %773 = vdwg.mxu0
    %774 = vmatpush.bf16.msra.mxu0 %v612
    %775 = vmatpush.bf16.msra.mxu0 %v610
    %776 = vmatpush.bf16.msra.mxu0 %v608
    %777 = vmatpush.bf16.msra.mxu0 %v606
    %778 = vmatpush.bf16.msra.mxu0 %v604
    %779 = vmatpush.bf16.msra.mxu0 %v602
    %780 = vmatpush.bf16.msra.mxu0 %v600
    %781 = vmatpush.bf16.msra.mxu0 %v598
    %782 = vmatmul.bf16.gmra.mxu0 %v316
    %v783 = vpop.f32.mrf.mxu0
    %v784 = vadd.f32 %v771, %v783
    %v785 = vpop.f32.mrf.mxu0
    %786 = vdwg.mxu0
    %787 = vmatpush.bf16.msra.mxu0 %v628
    %788 = vmatpush.bf16.msra.mxu0 %v626
    %789 = vmatpush.bf16.msra.mxu0 %v624
    %790 = vmatpush.bf16.msra.mxu0 %v622
    %791 = vmatpush.bf16.msra.mxu0 %v620
    %792 = vmatpush.bf16.msra.mxu0 %v618
    %793 = vmatpush.bf16.msra.mxu0 %v616
    %794 = vmatpush.bf16.msra.mxu0 %v614
    %795 = vmatmul.bf16.gmra.mxu0 %v317
    %v796 = vpop.f32.mrf.mxu0
    %v797 = vadd.f32 %v784, %v796
    %v798 = vpop.f32.mrf.mxu0
    %799 = vdwg.mxu0
    %800 = vmatpush.bf16.msra.mxu0 %v644
    %801 = vmatpush.bf16.msra.mxu0 %v642
    %802 = vmatpush.bf16.msra.mxu0 %v640
    %803 = vmatpush.bf16.msra.mxu0 %v638
    %804 = vmatpush.bf16.msra.mxu0 %v636
    %805 = vmatpush.bf16.msra.mxu0 %v634
    %806 = vmatpush.bf16.msra.mxu0 %v632
    %807 = vmatpush.bf16.msra.mxu0 %v630
    %808 = vmatmul.bf16.gmra.mxu0 %v318
    %v809 = vpop.f32.mrf.mxu0
    %v810 = vadd.f32 %v797, %v809
    %v811 = vpop.f32.mrf.mxu0
    %812 = vdwg.mxu0
    %v813 = vxor.u32 %v758, 2147483648
    %v814 = vxor.u32 %v810, 2147483648
    %v815 = vmul.f32 %v813, 1.442695
    %v816 = vpow.pop %v815
    %v817 = vmul.f32 %v814, 1.442695
    %v818 = vpow.pop %v817
    %v819 = vadd.f32 %v816, 1.0
    %v820 = vadd.f32 %v818, 1.0
    %v821 = vrcp.pop %v819
    %v822 = vmul.f32 %v819, %v821
    %v823 = vsub.f32 1.0, %v822
    %v824 = vmul.f32 %v821, %v823
    %v825 = vadd.f32 %v821, %v824
    %vm826 = vweird.f32 %v819
    %vm827 = vweird.f32 %v821
    %vm828 = vmor %vm826, %vm827
    %v829 = vsel %vm828, %v821, %v825
    %v830 = vand.u32 2147483647, %v819
    %vm831 = vcmp.eq.f32.partialorder %v830, 8.507059e+37
    %v832 = vand.u32 %v819, 2147483648
    %v833 = vor.u32 1.1754944e-38, %v832
    %v834 = vsel %vm831, %v833, %v829
    %v835 = vmul.f32 1.0, %v834
    %v836 = vrcp.pop %v820
    %v837 = vmul.f32 %v820, %v836
    %v838 = vsub.f32 1.0, %v837
    %v839 = vmul.f32 %v836, %v838
    %v840 = vadd.f32 %v836, %v839
    %vm841 = vweird.f32 %v820
    %vm842 = vweird.f32 %v836
    %vm843 = vmor %vm841, %vm842
    %v844 = vsel %vm843, %v836, %v840
    %v845 = vand.u32 2147483647, %v820
    %vm846 = vcmp.eq.f32.partialorder %v845, 8.507059e+37
    %v847 = vand.u32 %v820, 2147483648
    %v848 = vor.u32 1.1754944e-38, %v847
    %v849 = vsel %vm846, %v848, %v844
    %v850 = vmul.f32 1.0, %v849
    %v851 = vpack.c.bf16 %v835, %v835
    %v852 = vpack.c.bf16 %v850, %v850
    %v853 = vld [vmem:[#allocation10] sm:$0xf]
    %v854 = vld [vmem:[#allocation10 + $0x4] sm:$0xf]
    %v855 = vld [vmem:[#allocation10 + $0x8] sm:$0xf]
    %v856 = vld [vmem:[#allocation10 + $0xc] sm:$0xf]
    %v857 = vld [vmem:[#allocation10 + $0x10] sm:$0xf]
    %v858 = vld [vmem:[#allocation10 + $0x14] sm:$0xf]
    %v859 = vld [vmem:[#allocation10 + $0x18] sm:$0xf]
    %v860 = vld [vmem:[#allocation10 + $0x1c] sm:$0xf]
    %v861 = vld [vmem:[#allocation10 + $0x20] sm:$0xf]
    %v862 = vld [vmem:[#allocation10 + $0x24] sm:$0xf]
    %v863 = vld [vmem:[#allocation10 + $0x28] sm:$0xf]
    %v864 = vld [vmem:[#allocation10 + $0x2c] sm:$0xf]
    %v865 = vld [vmem:[#allocation10 + $0x30] sm:$0xf]
    %v866 = vld [vmem:[#allocation10 + $0x34] sm:$0xf]
    %v867 = vld [vmem:[#allocation10 + $0x38] sm:$0xf]
    %v868 = vld [vmem:[#allocation10 + $0x3c] sm:$0xf]
    %v869 = vld [vmem:[#allocation10 + $0x40] sm:$0xf]
    %v870 = vld [vmem:[#allocation10 + $0x44] sm:$0xf]
    %v871 = vld [vmem:[#allocation10 + $0x48] sm:$0xf]
    %v872 = vld [vmem:[#allocation10 + $0x4c] sm:$0xf]
    %v873 = vld [vmem:[#allocation10 + $0x50] sm:$0xf]
    %v874 = vld [vmem:[#allocation10 + $0x54] sm:$0xf]
    %v875 = vld [vmem:[#allocation10 + $0x58] sm:$0xf]
    %v876 = vld [vmem:[#allocation10 + $0x5c] sm:$0xf]
    %v877 = vld [vmem:[#allocation10 + $0x60] sm:$0xf]
    %v878 = vld [vmem:[#allocation10 + $0x64] sm:$0xf]
    %v879 = vld [vmem:[#allocation10 + $0x68] sm:$0xf]
    %v880 = vld [vmem:[#allocation10 + $0x6c] sm:$0xf]
    %v881 = vld [vmem:[#allocation10 + $0x70] sm:$0xf]
    %v882 = vld [vmem:[#allocation10 + $0x74] sm:$0xf]
    %v883 = vld [vmem:[#allocation10 + $0x78] sm:$0xf]
    %v884 = vld [vmem:[#allocation10 + $0x7c] sm:$0xf]
    %v885 = vld [vmem:[%s6] sm:$0x1]
    %v887 = vperm.slane %v885, 0
    %v921 = vunpack.c.l.b16 %v853
    %v922 = vunpack.c.l.b16 %v854
    %v923 = vunpack.c.l.b16 %v855
    %v924 = vunpack.c.l.b16 %v856
    %v925 = vunpack.c.l.b16 %v857
    %v926 = vunpack.c.l.b16 %v858
    %v927 = vunpack.c.l.b16 %v859
    %v928 = vunpack.c.l.b16 %v860
    %v929 = vunpack.c.l.b16 %v861
    %v930 = vunpack.c.l.b16 %v862
    %v931 = vunpack.c.l.b16 %v863
    %v932 = vunpack.c.l.b16 %v864
    %v933 = vunpack.c.l.b16 %v865
    %v934 = vunpack.c.l.b16 %v866
    %v935 = vunpack.c.l.b16 %v867
    %v936 = vunpack.c.l.b16 %v868
    %v937 = vunpack.c.l.b16 %v869
    %v938 = vunpack.c.l.b16 %v870
    %v939 = vunpack.c.l.b16 %v871
    %v940 = vunpack.c.l.b16 %v872
    %v941 = vunpack.c.l.b16 %v873
    %v942 = vunpack.c.l.b16 %v874
    %v943 = vunpack.c.l.b16 %v875
    %v944 = vunpack.c.l.b16 %v876
    %v945 = vunpack.c.l.b16 %v877
    %v946 = vunpack.c.l.b16 %v878
    %v947 = vunpack.c.l.b16 %v879
    %v948 = vunpack.c.l.b16 %v880
    %v949 = vunpack.c.l.b16 %v881
    %v950 = vunpack.c.l.b16 %v882
    %v951 = vunpack.c.l.b16 %v883
    %v952 = vunpack.c.l.b16 %v884
    %v953 = vpack.c.b16 %v922, %v921
    %v954 = vpack.c.b16 %v924, %v923
    %v955 = vpack.c.b16 %v926, %v925
    %v956 = vpack.c.b16 %v928, %v927
    %v957 = vpack.c.b16 %v930, %v929
    %v958 = vpack.c.b16 %v932, %v931
    %v959 = vpack.c.b16 %v934, %v933
    %v960 = vpack.c.b16 %v936, %v935
    %v961 = vpack.c.b16 %v938, %v937
    %v962 = vpack.c.b16 %v940, %v939
    %v963 = vpack.c.b16 %v942, %v941
    %v964 = vpack.c.b16 %v944, %v943
    %v965 = vpack.c.b16 %v946, %v945
    %v966 = vpack.c.b16 %v948, %v947
    %v967 = vpack.c.b16 %v950, %v949
    %v968 = vpack.c.b16 %v952, %v951
    %985 = vmatpush.bf16.msra.mxu0 %v960
    %986 = vmatpush.bf16.msra.mxu0 %v959
    %987 = vmatpush.bf16.msra.mxu0 %v958
    %988 = vmatpush.bf16.msra.mxu0 %v957
    %989 = vmatpush.bf16.msra.mxu0 %v956
    %990 = vmatpush.bf16.msra.mxu0 %v955
    %991 = vmatpush.bf16.msra.mxu0 %v954
    %992 = vmatpush.bf16.msra.mxu0 %v953
    %993 = vmatmul.bf16.gmra.mxu0 %v851
    %v994 = vpop.f32.mrf.mxu0
    %v995 = vadd.f32 %v887, %v994
    %v996 = vpop.f32.mrf.mxu0
    %997 = vdwg.mxu0
    %998 = vmatpush.bf16.msra.mxu0 %v968
    %999 = vmatpush.bf16.msra.mxu0 %v967
    %1000 = vmatpush.bf16.msra.mxu0 %v966
    %1001 = vmatpush.bf16.msra.mxu0 %v965
    %1002 = vmatpush.bf16.msra.mxu0 %v964
    %1003 = vmatpush.bf16.msra.mxu0 %v963
    %1004 = vmatpush.bf16.msra.mxu0 %v962
    %1005 = vmatpush.bf16.msra.mxu0 %v961
    %1006 = vmatmul.bf16.gmra.mxu0 %v852
    %v1007 = vpop.f32.mrf.mxu0
    %v1008 = vadd.f32 %v995, %v1007
    %v1009 = vpop.f32.mrf.mxu0
    %1010 = vdwg.mxu0
    %v1011 = vxor.u32 %v1008, 2147483648
    %v1012 = vmul.f32 %v1011, 1.442695
    %v1013 = vpow.pop %v1012
    %v1014 = vadd.f32 %v1013, 1.0
    %v1015 = vrcp.pop %v1014
    %v1016 = vmul.f32 %v1014, %v1015
    %v1017 = vsub.f32 1.0, %v1016
    %v1018 = vmul.f32 %v1015, %v1017
    %v1019 = vadd.f32 %v1015, %v1018
    %vm1020 = vweird.f32 %v1014
    %vm1021 = vweird.f32 %v1015
    %vm1022 = vmor %vm1020, %vm1021
    %v1023 = vsel %vm1022, %v1015, %v1019
    %v1024 = vand.u32 2147483647, %v1014
    %vm1025 = vcmp.eq.f32.partialorder %v1024, 8.507059e+37
    %v1026 = vand.u32 %v1014, 2147483648
    %v1027 = vor.u32 1.1754944e-38, %v1026
    %v1028 = vsel %vm1025, %v1027, %v1023
    %v1029 = vmul.f32 1.0, %v1028
    %v1030 = vpack.c.bf16 %v1029, %v1029
    %v1031 = vld [vmem:[#allocation11] sm:$0xf]
    %v1032 = vld [vmem:[#allocation11 + $0x4] sm:$0xf]
    %v1033 = vld [vmem:[#allocation11 + $0x8] sm:$0xf]
    %v1034 = vld [vmem:[#allocation11 + $0xc] sm:$0xf]
    %v1035 = vld [vmem:[#allocation11 + $0x10] sm:$0xf]
    %v1036 = vld [vmem:[#allocation11 + $0x14] sm:$0xf]
    %v1037 = vld [vmem:[#allocation11 + $0x18] sm:$0xf]
    %v1038 = vld [vmem:[#allocation11 + $0x1c] sm:$0xf]
    %v1039 = vld [vmem:[#allocation11 + $0x20] sm:$0xf]
    %v1040 = vld [vmem:[#allocation11 + $0x24] sm:$0xf]
    %v1041 = vld [vmem:[#allocation11 + $0x28] sm:$0xf]
    %v1042 = vld [vmem:[#allocation11 + $0x2c] sm:$0xf]
    %v1043 = vld [vmem:[#allocation11 + $0x30] sm:$0xf]
    %v1044 = vld [vmem:[#allocation11 + $0x34] sm:$0xf]
    %v1045 = vld [vmem:[#allocation11 + $0x38] sm:$0xf]
    %v1046 = vld [vmem:[#allocation11 + $0x3c] sm:$0xf]
    %v1047 = vld [vmem:[%s8] sm:$0x1]
    %v1049 = vperm.slane %v1047, 0
    %v1067 = vunpack.c.l.b16 %v1031
    %v1068 = vunpack.c.l.b16 %v1032
    %v1069 = vunpack.c.l.b16 %v1033
    %v1070 = vunpack.c.l.b16 %v1034
    %v1071 = vunpack.c.l.b16 %v1035
    %v1072 = vunpack.c.l.b16 %v1036
    %v1073 = vunpack.c.l.b16 %v1037
    %v1074 = vunpack.c.l.b16 %v1038
    %v1075 = vunpack.c.l.b16 %v1039
    %v1076 = vunpack.c.l.b16 %v1040
    %v1077 = vunpack.c.l.b16 %v1041
    %v1078 = vunpack.c.l.b16 %v1042
    %v1079 = vunpack.c.l.b16 %v1043
    %v1080 = vunpack.c.l.b16 %v1044
    %v1081 = vunpack.c.l.b16 %v1045
    %v1082 = vunpack.c.l.b16 %v1046
    %v1083 = vpack.c.b16 %v1068, %v1067
    %v1084 = vpack.c.b16 %v1070, %v1069
    %v1085 = vpack.c.b16 %v1072, %v1071
    %v1086 = vpack.c.b16 %v1074, %v1073
    %v1087 = vpack.c.b16 %v1076, %v1075
    %v1088 = vpack.c.b16 %v1078, %v1077
    %v1089 = vpack.c.b16 %v1080, %v1079
    %v1090 = vpack.c.b16 %v1082, %v1081
    %1099 = vmatpush.bf16.msra.mxu0 %v1090
    %1100 = vmatpush.bf16.msra.mxu0 %v1089
    %1101 = vmatpush.bf16.msra.mxu0 %v1088
    %1102 = vmatpush.bf16.msra.mxu0 %v1087
    %1103 = vmatpush.bf16.msra.mxu0 %v1086
    %1104 = vmatpush.bf16.msra.mxu0 %v1085
    %1105 = vmatpush.bf16.msra.mxu0 %v1084
    %1106 = vmatpush.bf16.msra.mxu0 %v1083
    %1107 = vmatmul.bf16.gmra.mxu0 %v1030
    %v1108 = vpop.f32.mrf.mxu0
    %v1109 = vadd.f32 %v1049, %v1108
    %v1110 = vpop.f32.mrf.mxu0
    %1111 = vdwg.mxu0
    %1113 = vrot.lane.b32.xlu0 %v1109, 1
    %v1114 = vpop.permute.xlu0 %1113
    %v1116 = vsub.f32 %v1109, %v1114
    %v1117 = vlaneseq
    %v1118 = vand.u32 %v1117, 127
    %vm1119 = vcmp.eq.s32.totalorder %v1118, 0
    %v1120 = vsel %vm1119, 1.0, -1.0
    %1122 = vset.pattern.permute.xlu0 1
    %1123 = vperm.xlu0 %1122, %v1116
    %v1124 = vpop.permute.xlu0 %1123
    %v1126 = vmul.f32 %v1124, %v1120
    %v1127 = vmax.f32 %v1126, 0.0
    %vm1128 = vcmp.ne.f32.partialorder %v1126, %v1126
    %v1129 = vadd.f32 %v1126, 0.0
    %v1130 = vand.u32 2147483647, %v1126
    %v1131 = vsub.f32 0.0, %v1130
    %v1132 = vmul.f32 %v1131, 1.442695
    %v1133 = vpow.pop %v1132
    %v1134 = vadd.f32 %v1133, 1.0
    %v1135 = vlog2.pop %v1134
    %v1136 = vmul.f32 %v1135, 0.6931472
    %v1137 = vmul.f32 -0.5, %v1133
    %v1138 = vadd.f32 %v1137, 1.0
    %v1139 = vmul.f32 %v1138, %v1133
    %v1140 = vand.u32 2147483647, %v1133
    %vm1141 = vcmp.lt.f32.partialorder %v1140, 0.0004427343
    %v1142 = vsel %vm1141, %v1139, %v1136
    %v1143 = vadd.f32 %v1127, %v1142
    %v1144 = vsel %vm1128, %v1129, %v1143
    %v1145 = vsub.f32 0.0, %v1144
    %1146 = vst [vmem:[#allocation13] sm:$0xff] %v1145
    // Predicated region
    $region62: #{tpu_custom_call.1} parent=1 // pred_check
      _
    $region63: #{tpu_custom_call.1} parent=1 // pred_check_branch
      %1148 = sbr.rel (0) target = $region65
    $region64: #{tpu_custom_call.1} parent=1 // pred_region
      %1150 = vsyncadd [#allocation4], 0
      %s1152 = sshll.u32 [#allocation13], 4
      %s1153 = int_to_ptr.vmem [resolvable:$true] %s1152
      %s1154 = sshll.u32 %s9, 4
      %s1155 = int_to_ptr.hbm [resolvable:$true] %s1154
      %1157 = dma.vmem_to_hbm [thread:$0]  %s1153, 128, %s1155, [#allocation4]
    $region65: #{tpu_custom_call.1} parent=1 // pred_fallthru
      _
    // Predicated region
    $region66: #{tpu_custom_call.1} parent=1 // pred_check
      _
    $region67: #{tpu_custom_call.1} parent=1 // pred_check_branch
      %1159 = sbr.rel (0) target = $region69
    $region68: #{tpu_custom_call.1} parent=1 // pred_region
      %1161 = dma.done [#allocation4], 128
    $region69: #{tpu_custom_call.1} parent=1 // pred_fallthru
      _
    %1162 = vsyncpa [#allocation3], 1
    %1163 = vsyncpa [#allocation6], 1
    %1164 = vsyncpa [#allocation9], 1
    %1165 = vsyncpa [#allocation12], 1
    %1166 = vsyncpa [#allocation4], 1

</llo_original>
